<compile_context>
chip_gen: v6e
topology: v6e:2x2x1
jax: 0.10.0
libtpu: 0.0.40
codegen_flags: <defaults>
</compile_context>

<pallas_src>
import functools

import jax
import jax.numpy as jnp
from jax.experimental import pallas as pl
from jax.experimental.pallas import tpu as pltpu


# --------------------------------------------------------------------------------------
# Small helpers
# --------------------------------------------------------------------------------------
def _round_up(n, m):
    return ((n + m - 1) // m) * m


def _sigmoid(x):
    # sigmoid(x) == 0.5 * (tanh(0.5 * x) + 1): one EUP (tanh) push instead of exp + recip,
    # keeping the single per-bundle EUP slot off the serial critical path.
    return 0.5 * (jnp.tanh(0.5 * x) + 1.0)


def _pad_gate_cols(a, h, h_pad):
    """Pad the 4 gate column groups of a [..., 4*h] array independently to [..., 4*h_pad]
    so each gate occupies a 128-lane-aligned column group."""
    if h_pad == h:
        return a
    lead = a.shape[:-1]
    a4 = a.reshape(*lead, 4, h)
    a4 = jnp.pad(a4, [(0, 0)] * len(lead) + [(0, 0), (0, h_pad - h)])
    return a4.reshape(*lead, 4 * h_pad)


def _const_block_spec(block_shape, index_map):
    """BlockSpec for a block whose index never changes across the grid: single-buffer it
    (pl.Buffered(1)) so a large weight block is not double-buffered in VMEM (matters most
    on v7x's 64 MiB VMEM).  Falls back gracefully if pipeline_mode is unavailable."""
    if hasattr(pl, "Buffered"):
        try:
            return pl.BlockSpec(block_shape, index_map, pipeline_mode=pl.Buffered(1))
        except TypeError:
            pass
    return pl.BlockSpec(block_shape, index_map)


# --------------------------------------------------------------------------------------
# Generic fully-parallel  out = x @ w + b  kernel (gates_x table precompute + vocab proj).
# --------------------------------------------------------------------------------------
def _matmul_bias_kernel(x_ref, w_ref, b_ref, o_ref, *, compute_dtype):
    acc = jnp.dot(x_ref[...].astype(compute_dtype), w_ref[...],
                  preferred_element_type=jnp.float32)
    o_ref[...] = (acc + b_ref[...]).astype(o_ref.dtype)


def _pick_tile(n, granule, cap):
    best = granule
    t = granule
    lim = min(n, cap)
    while t <= lim:
        if n % t == 0:
            best = t
        t += granule
    return best


def _pick_tiles(rows, k, cols, budget_bytes):
    """Largest (tile_r, tile_c) dividing (rows, cols) such that the double-buffered input
    and output tiles stay under the VMEM budget (re-derived per shape, not fixed caps)."""
    cap_r, cap_c = 512, 2048
    while True:
        tr = _pick_tile(rows, 8, cap_r)
        tc = _pick_tile(cols, 128, cap_c)
        need = 2 * 4 * (tr * k + k * tc + tc + tr * tc)   # 2 buffers x f32 words
        if need <= budget_bytes or (cap_r <= 8 and cap_c <= 128):
            return tr, tc
        if cap_c > 128:
            cap_c //= 2
        else:
            cap_r //= 2


def _matmul_bias(x, w, b, *, compute_dtype, vmem_budget=24 * 1024 * 1024):
    rows, k = x.shape
    cols = w.shape[1]
    tile_r, tile_c = _pick_tiles(rows, k, cols, vmem_budget)
    kern = functools.partial(_matmul_bias_kernel, compute_dtype=compute_dtype)
    return pl.pallas_call(
        kern,
        out_shape=jax.ShapeDtypeStruct((rows, cols), jnp.float32),
        grid=(rows // tile_r, cols // tile_c),
        in_specs=[
            pl.BlockSpec((tile_r, k), lambda i, j: (i, 0)),
            pl.BlockSpec((k, tile_c), lambda i, j: (0, j)),
            pl.BlockSpec((1, tile_c), lambda i, j: (0, j)),
        ],
        out_specs=pl.BlockSpec((tile_r, tile_c), lambda i, j: (i, j)),
        compiler_params=pltpu.CompilerParams(
            dimension_semantics=("parallel", "parallel"),   # both TCs usable on v7x
            vmem_limit_bytes=32 * 1024 * 1024,
        ),
    )(x.astype(compute_dtype), w.astype(compute_dtype), b.astype(jnp.float32))


# --------------------------------------------------------------------------------------
# Sequential LSTM recurrence over time chunks (only h_{t-1} @ W_hh on the serial path).
# --------------------------------------------------------------------------------------
def _lstm_recurrent_kernel(gx_ref, h0_ref, c0_ref, whh_ref,
                           hseq_ref, hT_ref, cT_ref,
                           *, t_chunk, h_pad, t_total, compute_dtype):
    ci = pl.program_id(0)

    # Initialize the recurrent carry; the constant-index output blocks stay VMEM-resident
    # across all grid steps, so they double as the carry (no extra scratch needed).
    @pl.when(ci == 0)
    def _():
        hT_ref[...] = h0_ref[...]
        cT_ref[...] = c0_ref[...]

    w_hh = whh_ref[...]            # [H_pad, 4*H_pad]  (compute_dtype), hoisted out of loop
    h = hT_ref[...]                # [B_pad, H_pad] f32 carry
    c = cT_ref[...]                # [B_pad, H_pad] f32 carry

    pad_tail = (t_total % t_chunk) != 0
    hs = []

    # Fully-unrolled chunk loop: static indices everywhere, visible ILP for the scheduler.
    for s in range(t_chunk):
        # Input half of the gates (x @ W_ih + b) was precomputed + gathered outside;
        # only the K = H_pad recurrent matmul remains on the serial critical path.
        gates = gx_ref[s] + jnp.dot(h.astype(compute_dtype), w_hh,
                                    preferred_element_type=jnp.float32)   # [B_pad, 4*H_pad]

        # PyTorch gate order i, f, g, o; each slice is a 128-lane-aligned whole-vreg view.
        i_g = _sigmoid(gates[:, 0 * h_pad:1 * h_pad])
        f_g = _sigmoid(gates[:, 1 * h_pad:2 * h_pad])
        g_g = jnp.tanh(gates[:, 2 * h_pad:3 * h_pad])
        o_g = _sigmoid(gates[:, 3 * h_pad:4 * h_pad])

        c_n = f_g * c + i_g * g_g
        h_n = o_g * jnp.tanh(c_n)

        if pad_tail:
            # T was padded up to a multiple of t_chunk; masked steps leave the carry alone.
            valid = (ci * t_chunk + s) < t_total
            c = jnp.where(valid, c_n, c)
            h = jnp.where(valid, h_n, h)
        else:
            c, h = c_n, h_n
        hs.append(h)

    # One dense, lane-aligned store of the whole chunk (t_chunk * H_pad lanes wide).
    hseq_ref[...] = jnp.concatenate(hs, axis=-1)

    # Persist the carry (resident output blocks; written back to HBM only once at the end).
    hT_ref[...] = h
    cT_ref[...] = c


# --------------------------------------------------------------------------------------
# Wrapper
# --------------------------------------------------------------------------------------
def decoder_lstm_forward(x_tokens, hidden_states, params, *, compute_dtype=jnp.float32):
    """x_tokens: int32 [B, T]; hidden_states: (h0, c0) each [1, B, H] (torch.nn.LSTM layout).

    compute_dtype controls the MXU matmul operand dtype (use jnp.bfloat16 on v6e/v7x);
    the (h, c) carry, gate math and accumulation are always f32.
    """
    emb_table = params["emb"]            # [input_size, E]
    w_ih = params["w_ih"]                # [E, 4H]   (pre-transposed vs torch's [4H, E])
    w_hh = params["w_hh"]                # [H, 4H]
    b = params["b"]                      # [1, 4H]   (b_ih + b_hh combined)
    w_out = params["w_out"]              # [H, V]
    b_out = params["b_out"]              # [1, V]

    h0, c0 = hidden_states
    B, T = x_tokens.shape
    H = w_hh.shape[0]
    V = w_out.shape[1]
    Vin = emb_table.shape[0]

    B_pad = _round_up(B, 8)              # sublane granule: dense batch-row stores
    H_pad = _round_up(H, 128)            # per-gate lane alignment; 4*H_pad multiple of 256
    V_pad = _round_up(V, 128)            # lane-dense projection output
    Vin_pad = _round_up(Vin, 8)

    t_chunk = T if T < 8 else 8
    T_pad = _round_up(T, t_chunk)        # padded tail steps are masked inside the kernel
    n_chunks = T_pad // t_chunk

    # ---- Kernel A: gates_x table = emb @ W_ih + b (embedding + input projection fused).
    emb_p = jnp.pad(emb_table, ((0, Vin_pad - Vin), (0, 0)))
    w_ih_g = _pad_gate_cols(w_ih, H, H_pad)                                # [E, 4*H_pad]
    b_g = _pad_gate_cols(b.astype(jnp.float32), H, H_pad)                  # [1, 4*H_pad]
    gx_table = _matmul_bias(emb_p, w_ih_g, b_g, compute_dtype=compute_dtype)  # [Vin_pad, 4*H_pad] f32

    # ---- Glue: gather per-token input gates directly into time-major layout (one gather;
    #      no [B, T, E] materialization and no per-step x @ W_ih in the recurrence).
    tok_p = jnp.pad(x_tokens, ((0, B_pad - B), (0, T_pad - T)))            # [B_pad, T_pad]
    gates_x = gx_table[tok_p.T]                                            # [T_pad, B_pad, 4*H_pad] f32

    # ---- Recurrent weights / initial state (f32 carries, compute_dtype matmul operands).
    w_hh_g = _pad_gate_cols(w_hh, H, H_pad)
    w_hh_p = jnp.pad(w_hh_g, ((0, H_pad - H), (0, 0))).astype(compute_dtype)   # [H_pad, 4*H_pad]
    h0_p = jnp.pad(h0[0].astype(jnp.float32), ((0, B_pad - B), (0, H_pad - H)))
    c0_p = jnp.pad(c0[0].astype(jnp.float32), ((0, B_pad - B), (0, H_pad - H)))

    rec_kernel = functools.partial(
        _lstm_recurrent_kernel,
        t_chunk=t_chunk, h_pad=H_pad, t_total=T, compute_dtype=compute_dtype)

    h_seq, hT_p, cT_p = pl.pallas_call(
        rec_kernel,
        out_shape=(
            jax.ShapeDtypeStruct((B_pad, T_pad * H_pad), jnp.float32),   # lane-dense h sequence
            jax.ShapeDtypeStruct((B_pad, H_pad), jnp.float32),           # h_T
            jax.ShapeDtypeStruct((B_pad, H_pad), jnp.float32),           # c_T
        ),
        grid=(n_chunks,),
        in_specs=[
            pl.BlockSpec((t_chunk, B_pad, 4 * H_pad), lambda t: (t, 0, 0)),   # gates_x chunks
            _const_block_spec((B_pad, H_pad), lambda t: (0, 0)),              # h0
            _const_block_spec((B_pad, H_pad), lambda t: (0, 0)),              # c0
            _const_block_spec((H_pad, 4 * H_pad), lambda t: (0, 0)),          # W_hh
        ],
        out_specs=(
            pl.BlockSpec((B_pad, t_chunk * H_pad), lambda t: (0, t)),         # h_seq
            pl.BlockSpec((B_pad, H_pad), lambda t: (0, 0)),                   # h_T (carry)
            pl.BlockSpec((B_pad, H_pad), lambda t: (0, 0)),                   # c_T (carry)
        ),
        compiler_params=pltpu.CompilerParams(
            dimension_semantics=("arbitrary",),        # inherently sequential recurrence
            vmem_limit_bytes=32 * 1024 * 1024,
        ),
    )(gates_x, h0_p, c0_p, w_hh_p)

    # ---- Kernel C: vocab projection over the full slab (fully parallel, lane-dense tiles).
    h2d = h_seq.reshape(B_pad * T_pad, H_pad)                              # contiguous reshape
    w_out_p = jnp.pad(w_out, ((0, H_pad - H), (0, V_pad - V)))             # [H_pad, V_pad]
    b_out_p = jnp.pad(b_out.astype(jnp.float32), ((0, 0), (0, V_pad - V)))  # [1, V_pad]
    out2d = _matmul_bias(h2d, w_out_p, b_out_p, compute_dtype=compute_dtype)

    out = out2d.reshape(B_pad, T_pad, V_pad)[:B, :T, :V]                   # [B, T, V] batch_first
    hT = hT_p[:B, :H][None]                                                # [1, B, H]
    cT = cT_p[:B, :H][None]                                                # [1, B, H]
    return out, (hT, cT)


# --------------------------------------------------------------------------------------
# Pure-JAX reference (mirrors torch semantics) for correctness checks.
# --------------------------------------------------------------------------------------
def _reference_forward(x_tokens, hidden_states, params):
    emb_table = params["emb"]
    w_ih, w_hh, b = params["w_ih"], params["w_hh"], params["b"]
    w_out, b_out = params["w_out"], params["b_out"]
    h, c = hidden_states[0][0], hidden_states[1][0]
    H = w_hh.shape[0]
    x_emb = emb_table[x_tokens]                                            # [B, T, E]

    def step(carry, x_t):
        h, c = carry
        gates = x_t @ w_ih + h @ w_hh + b[0]
        i = jax.nn.sigmoid(gates[:, 0:H])
        f = jax.nn.sigmoid(gates[:, H:2 * H])
        g = jnp.tanh(gates[:, 2 * H:3 * H])
        o = jax.nn.sigmoid(gates[:, 3 * H:4 * H])
        c = f * c + i * g
        h = o * jnp.tanh(c)
        return (h, c), h @ w_out + b_out[0]

    (hT, cT), outs = jax.lax.scan(step, (h, c), jnp.transpose(x_emb, (1, 0, 2)))
    return jnp.transpose(outs, (1, 0, 2)), (hT[None], cT[None])


if __name__ == "__main__":
    input_size = 64
    hidden_size = 32
    embeddings_dims = 32
    vocab_size = 64
    B, T = 2, 8

    key = jax.random.PRNGKey(0)
    ks = jax.random.split(key, 14)

    params = {
        "emb":   jax.random.normal(ks[0], (input_size, embeddings_dims), jnp.float32) * 0.1,
        # Stored pre-transposed ([in, 4H]) relative to PyTorch's [4H, in]; gate order i,f,g,o.
        "w_ih":  jax.random.normal(ks[1], (embeddings_dims, 4 * hidden_size), jnp.float32) * 0.1,
        "w_hh":  jax.random.normal(ks[2], (hidden_size, 4 * hidden_size), jnp.float32) * 0.1,
        # b = b_ih + b_hh (combined).
        "b":     (jax.random.normal(ks[3], (1, 4 * hidden_size), jnp.float32) * 0.1
                  + jax.random.normal(ks[4], (1, 4 * hidden_size), jnp.float32) * 0.1),
        "w_out": jax.random.normal(ks[5], (hidden_size, vocab_size), jnp.float32) * 0.1,
        "b_out": jax.random.normal(ks[6], (1, vocab_size), jnp.float32) * 0.1,
    }

    x_tokens = jax.random.randint(ks[7], (B, T), 0, input_size, dtype=jnp.int32)
    h0 = jax.random.normal(ks[8], (1, B, hidden_size), jnp.float32)
    c0 = jax.random.normal(ks[9], (1, B, hidden_size), jnp.float32)

    # ---- f32 path vs reference ----
    out, (hT, cT) = decoder_lstm_forward(x_tokens, (h0, c0), params)
    out = jax.block_until_ready(out)
    ref_out, (ref_hT, ref_cT) = _reference_forward(x_tokens, (h0, c0), params)
    assert out.shape == (B, T, vocab_size)
    assert hT.shape == (1, B, hidden_size) and cT.shape == (1, B, hidden_size)
    assert jnp.allclose(out, ref_out, atol=1e-4, rtol=1e-4)
    assert jnp.allclose(hT, ref_hT, atol=1e-4, rtol=1e-4)
    assert jnp.allclose(cT, ref_cT, atol=1e-4, rtol=1e-4)

    # ---- multi-chunk grid (T=16 -> 2 chunks) + batch padding (B=3 -> 8) ----
    B2, T2 = 3, 16
    x2 = jax.random.randint(ks[10], (B2, T2), 0, input_size, dtype=jnp.int32)
    h02 = jax.random.normal(ks[11], (1, B2, hidden_size), jnp.float32)
    c02 = jnp.zeros((1, B2, hidden_size), jnp.float32)
    out2, (hT2, cT2) = decoder_lstm_forward(x2, (h02, c02), params)
    out2 = jax.block_until_ready(out2)
    r2, (rh2, rc2) = _reference_forward(x2, (h02, c02), params)
    assert out2.shape == (B2, T2, vocab_size)
    assert jnp.allclose(out2, r2, atol=1e-4, rtol=1e-4)
    assert jnp.allclose(hT2, rh2, atol=1e-4, rtol=1e-4)
    assert jnp.allclose(cT2, rc2, atol=1e-4, rtol=1e-4)

    # ---- ragged time (T=11 -> padded to 16, tail steps masked out of the carry) ----
    B3, T3 = 2, 11
    x3 = jax.random.randint(ks[12], (B3, T3), 0, input_size, dtype=jnp.int32)
    h03 = jax.random.normal(ks[13], (1, B3, hidden_size), jnp.float32)
    c03 = jnp.zeros((1, B3, hidden_size), jnp.float32)
    out3, (hT3, cT3) = decoder_lstm_forward(x3, (h03, c03), params)
    out3 = jax.block_until_ready(out3)
    r3, (rh3, rc3) = _reference_forward(x3, (h03, c03), params)
    assert out3.shape == (B3, T3, vocab_size)
    assert jnp.allclose(out3, r3, atol=1e-4, rtol=1e-4)
    assert jnp.allclose(hT3, rh3, atol=1e-4, rtol=1e-4)
    assert jnp.allclose(cT3, rc3, atol=1e-4, rtol=1e-4)

    # ---- bf16 MXU-operand path (v6e/v7x): f32 carries / gate math / accumulation ----
    out_bf, _ = decoder_lstm_forward(x_tokens, (h0, c0), params, compute_dtype=jnp.bfloat16)
    out_bf = jax.block_until_ready(out_bf)
    assert bool(jnp.all(jnp.isfinite(out_bf)))
    assert float(jnp.max(jnp.abs(out_bf - ref_out))) < 0.1

    print("KERNEL_OK")
</pallas_src>

<mosaic_0001>
module attributes {stable_mosaic.version = 11 : i64} {
  func.func @_matmul_bias_kernel(%arg0: i32, %arg1: i32, %arg2: memref<64x32xf32, #tpu.memory_space<vmem>>, %arg3: memref<32x512xf32, #tpu.memory_space<vmem>>, %arg4: memref<1x512xf32, #tpu.memory_space<vmem>>, %arg5: memref<64x512xf32, #tpu.memory_space<vmem>>) attributes {dimension_semantics = [#tpu.dimension_semantics<parallel>, #tpu.dimension_semantics<parallel>], iteration_bounds = array<i64: 1, 1>, scalar_prefetch = 0 : i64, scratch_operands = 0 : i64, tpu.core_type = #tpu.core_type<tc>, window_params = [{transform_indices = @transform_0, window_bounds = array<i64: 64, 32>}, {transform_indices = @transform_1, window_bounds = array<i64: 32, 512>}, {transform_indices = @transform_2, window_bounds = array<i64: 1, 512>}, {transform_indices = @transform_3, window_bounds = array<i64: 64, 512>}]} {
    %c0 = arith.constant 0 : index
    %c0_0 = arith.constant 0 : index
    %0 = vector.load %arg2[%c0, %c0_0] : memref<64x32xf32, #tpu.memory_space<vmem>>, vector<64x32xf32>
    %c0_1 = arith.constant 0 : index
    %c0_2 = arith.constant 0 : index
    %1 = vector.load %arg3[%c0_1, %c0_2] : memref<32x512xf32, #tpu.memory_space<vmem>>, vector<32x512xf32>
    %cst = arith.constant dense<0.000000e+00> : vector<64x512xf32>
    %2 = tpu.matmul %0, %1, %cst {dimension_numbers = #tpu.dot_dimension_numbers<[1], [0], [0], [1], [0, 0, 1, 1], [], []>} : vector<64x32xf32>, vector<32x512xf32>, vector<64x512xf32> -> vector<64x512xf32>
    %c0_3 = arith.constant 0 : index
    %c0_4 = arith.constant 0 : index
    %3 = vector.load %arg4[%c0_3, %c0_4] : memref<1x512xf32, #tpu.memory_space<vmem>>, vector<1x512xf32>
    %4 = vector.broadcast %3 : vector<1x512xf32> to vector<64x512xf32>
    %5 = arith.addf %2, %4 : vector<64x512xf32>
    %c0_5 = arith.constant 0 : index
    %c0_6 = arith.constant 0 : index
    %6 = vector.load %arg5[%c0_5, %c0_6] : memref<64x512xf32, #tpu.memory_space<vmem>>, vector<64x512xf32>
    tpu.vector_store %arg5[%c0_5, %c0_6], %5 {strides = array<i32>} : memref<64x512xf32, #tpu.memory_space<vmem>>, vector<64x512xf32>,
    return
  }
  func.func @transform_0(%arg0: i32, %arg1: i32) -> (i32, i32) {
    %c0_i32 = arith.constant 0 : i32
    %c0_i32_0 = arith.constant 0 : i32
    return %arg0, %c0_i32 : i32, i32
  }
  func.func @transform_1(%arg0: i32, %arg1: i32) -> (i32, i32) {
    %c0_i32 = arith.constant 0 : i32
    %c0_i32_0 = arith.constant 0 : i32
    return %c0_i32, %arg1 : i32, i32
  }
  func.func @transform_2(%arg0: i32, %arg1: i32) -> (i32, i32) {
    %c0_i32 = arith.constant 0 : i32
    %c0_i32_0 = arith.constant 0 : i32
    return %c0_i32, %arg1 : i32, i32
  }
  func.func @transform_3(%arg0: i32, %arg1: i32) -> (i32, i32) {
    %c0_i32 = arith.constant 0 : i32
    return %arg0, %arg1 : i32, i32
  }
}

</mosaic_0001>

<llo_original>
// kernel: tpu_custom_call.1
$region0: #{tpu_custom_call.1}
  #allocation0 [shape = 'u32[]', space=smem, size = 0x4, offset = 0x4, fixed_abs, tag = 'smem constant byte address 0x4 - core index']
  #allocation1 [shape = 'u32[144,128]{1,0:T(1,128)}', space=vmem, size = 0x12000, scoped, tag = 'internal scratch']
  %s0 = inlined_call_operand.vmem [shape: f32[64,32], index: 0, kind: input, shape index: {}]
  %s1 = inlined_call_operand.hbm [shape: f32[32,512], index: 1, kind: input, shape index: {}]
  %s2 = inlined_call_operand.vmem [shape: f32[1,512], index: 2, kind: input, shape index: {}]
  %s3 = inlined_call_operand.hbm [shape: f32[64,512], index: 3, kind: output, shape index: {}]
  %s4 = sld [smem:[#allocation0]]
  $region26: #{tpu_custom_call.1} parent=0
    _
  %s6 = ssub.s32 1, %s4
  %s7 = scalar_select 0, %s6, %s4
  $region1: #{tpu_custom_call.1} parent=0
    #allocation2 [shape = 'u8[65536]{0}', space=vmem, size = 0x10000, scoped, tag = 'input window, operand 1, single buffered']
    #allocation3 [shape = 's32[1]{0}', space=sflag, size = 0x4, scoped, tag = 'scoped memory for tpu_custom_call.1']
    #allocation4 [shape = 's32[1]{0}', space=sflag, size = 0x4, scoped, tag = 'scoped memory for tpu_custom_call.1']
    #allocation5 [shape = 'u8[131072]{0}', space=vmem, size = 0x20000, scoped, tag = 'output window, operand 0, single buffered']
    %8 = vsyncpa [#allocation3], 0
    %9 = vsyncpa [#allocation4], 0
    // Predicated region
    $region2: #{tpu_custom_call.1} parent=1 // pred_check
      _
    $region3: #{tpu_custom_call.1} parent=1 // pred_check_branch
      %11 = sbr.rel (0) target = $region5
    $region4: #{tpu_custom_call.1} parent=1 // pred_region
      _
    $region5: #{tpu_custom_call.1} parent=1 // pred_fallthru
      _
    // Predicated region
    $region6: #{tpu_custom_call.1} parent=1 // pred_check
      _
    $region7: #{tpu_custom_call.1} parent=1 // pred_check_branch
      %13 = sbr.rel (0) target = $region9
    $region8: #{tpu_custom_call.1} parent=1 // pred_region
      %s15 = ssub.s32 2048, 2048
      %16 = vsyncadd [#allocation3], %s15
      %s17 = sshll.u32 [#allocation2], 4
      %s18 = int_to_ptr.vmem [resolvable:$true] %s17
      %23 = dma.hbm_to_vmem [thread:$0]  %s1, 2048, %s18, [#allocation3], 512, 512, 32
    $region9: #{tpu_custom_call.1} parent=1 // pred_fallthru
      _
    // Predicated region
    $region10: #{tpu_custom_call.1} parent=1 // pred_check
      _
    $region11: #{tpu_custom_call.1} parent=1 // pred_check_branch
      %25 = sbr.rel (0) target = $region13
    $region12: #{tpu_custom_call.1} parent=1 // pred_region
      _
    $region13: #{tpu_custom_call.1} parent=1 // pred_fallthru
      _
    // Predicated region
    $region14: #{tpu_custom_call.1} parent=1 // pred_check
      _
    $region15: #{tpu_custom_call.1} parent=1 // pred_check_branch
      %27 = sbr.rel (0) target = $region17
    $region16: #{tpu_custom_call.1} parent=1 // pred_region
      %28 = dma.done [#allocation3], 2048
    $region17: #{tpu_custom_call.1} parent=1 // pred_fallthru
      _
    %v29 = vld [vmem:[%s0] sm:$0xff]
    %v30 = vld [vmem:[%s0 + $0x8] sm:$0xff]
    %v31 = vld [vmem:[%s0 + $0x10] sm:$0xff]
    %v32 = vld [vmem:[%s0 + $0x18] sm:$0xff]
    %v33 = vld [vmem:[%s0 + $0x20] sm:$0xff]
    %v34 = vld [vmem:[%s0 + $0x28] sm:$0xff]
    %v35 = vld [vmem:[%s0 + $0x30] sm:$0xff]
    %v36 = vld [vmem:[%s0 + $0x38] sm:$0xff]
    %v37 = vld [vmem:[#allocation2] sm:$0xff]
    %v38 = vld [vmem:[#allocation2 + $0x8] sm:$0xff]
    %v39 = vld [vmem:[#allocation2 + $0x10] sm:$0xff]
    %v40 = vld [vmem:[#allocation2 + $0x18] sm:$0xff]
    %v41 = vld [vmem:[#allocation2 + $0x20] sm:$0xff]
    %v42 = vld [vmem:[#allocation2 + $0x28] sm:$0xff]
    %v43 = vld [vmem:[#allocation2 + $0x30] sm:$0xff]
    %v44 = vld [vmem:[#allocation2 + $0x38] sm:$0xff]
    %v45 = vld [vmem:[#allocation2 + $0x40] sm:$0xff]
    %v46 = vld [vmem:[#allocation2 + $0x48] sm:$0xff]
    %v47 = vld [vmem:[#allocation2 + $0x50] sm:$0xff]
    %v48 = vld [vmem:[#allocation2 + $0x58] sm:$0xff]
    %v49 = vld [vmem:[#allocation2 + $0x60] sm:$0xff]
    %v50 = vld [vmem:[#allocation2 + $0x68] sm:$0xff]
    %v51 = vld [vmem:[#allocation2 + $0x70] sm:$0xff]
    %v52 = vld [vmem:[#allocation2 + $0x78] sm:$0xff]
    %v53 = vld [vmem:[%s2] sm:$0xf]
    %v55 = vlaneseq
    %v56 = vshrl.u32 %v55, 7
    %v57 = vsub.s32 0, %v56
    %v58 = vrot.slane %v53, %v57
    %v59 = vlaneseq
    %v60 = vshrl.u32 %v59, 7
    %v61 = vsub.s32 1, %v60
    %v62 = vrot.slane %v53, %v61
    %v63 = vlaneseq
    %v64 = vshrl.u32 %v63, 7
    %v65 = vsub.s32 2, %v64
    %v66 = vrot.slane %v53, %v65
    %v67 = vlaneseq
    %v68 = vshrl.u32 %v67, 7
    %v69 = vsub.s32 3, %v68
    %v70 = vrot.slane %v53, %v69
    %vm75 = vcmask 261120
    %v77 = vsel %vm75, %v29, 0
    %v80 = vsel %vm75, %v30, 0
    %v83 = vsel %vm75, %v31, 0
    %v86 = vsel %vm75, %v32, 0
    %v89 = vsel %vm75, %v33, 0
    %v92 = vsel %vm75, %v34, 0
    %v95 = vsel %vm75, %v35, 0
    %v98 = vsel %vm75, %v36, 0
    %100 = vmatprep.subr.mxu0 0.0
    %101 = vmatpush1.msra.mxu0 0.0
    %102 = vmatprep.subr.mxu0 0.0
    %103 = vmatpush1.msra.mxu0 0.0
    %104 = vmatprep.subr.mxu0 0.0
    %105 = vmatpush1.msra.mxu0 0.0
    %106 = vmatprep.subr.mxu0 0.0
    %107 = vmatpush1.msra.mxu0 0.0
    %108 = vmatprep.subr.mxu0 0.0
    %109 = vmatpush1.msra.mxu0 0.0
    %110 = vmatprep.subr.mxu0 0.0
    %111 = vmatpush1.msra.mxu0 0.0
    %112 = vmatprep.subr.mxu0 0.0
    %113 = vmatpush1.msra.mxu0 0.0
    %114 = vmatprep.subr.mxu0 0.0
    %115 = vmatpush1.msra.mxu0 0.0
    %116 = vmatprep.subr.mxu0 0.0
    %117 = vmatpush1.msra.mxu0 0.0
    %118 = vmatprep.subr.mxu0 0.0
    %119 = vmatpush1.msra.mxu0 0.0
    %120 = vmatprep.subr.mxu0 0.0
    %121 = vmatpush1.msra.mxu0 0.0
    %122 = vmatprep.subr.mxu0 0.0
    %123 = vmatpush1.msra.mxu0 0.0
    %124 = vmatprep.subr.mxu0 %v50
    %125 = vmatpush1.msra.mxu0 %v49
    %126 = vmatprep.subr.mxu0 %v46
    %127 = vmatpush1.msra.mxu0 %v45
    %128 = vmatprep.subr.mxu0 %v42
    %129 = vmatpush1.msra.mxu0 %v41
    %130 = vmatprep.subr.mxu0 %v38
    %131 = vmatpush1.msra.mxu0 %v37
    %132 = vmatprep.subr.mxu0 0.0
    %133 = vmatpush2.msra.mxu0 0.0
    %134 = vmatprep.subr.mxu0 0.0
    %135 = vmatpush2.msra.mxu0 0.0
    %136 = vmatprep.subr.mxu0 0.0
    %137 = vmatpush2.msra.mxu0 0.0
    %138 = vmatprep.subr.mxu0 0.0
    %139 = vmatpush2.msra.mxu0 0.0
    %140 = vmatprep.subr.mxu0 0.0
    %141 = vmatpush2.msra.mxu0 0.0
    %142 = vmatprep.subr.mxu0 0.0
    %143 = vmatpush2.msra.mxu0 0.0
    %144 = vmatprep.subr.mxu0 0.0
    %145 = vmatpush2.msra.mxu0 0.0
    %146 = vmatprep.subr.mxu0 0.0
    %147 = vmatpush2.msra.mxu0 0.0
    %148 = vmatprep.subr.mxu0 0.0
    %149 = vmatpush2.msra.mxu0 0.0
    %150 = vmatprep.subr.mxu0 0.0
    %151 = vmatpush2.msra.mxu0 0.0
    %152 = vmatprep.subr.mxu0 0.0
    %153 = vmatpush2.msra.mxu0 0.0
    %154 = vmatprep.subr.mxu0 0.0
    %155 = vmatpush2.msra.mxu0 0.0
    %156 = vmatprep.subr.mxu0 0.0
    %157 = vmatpush2.msra.mxu0 0.0
    %158 = vmatprep.subr.mxu0 0.0
    %159 = vmatpush2.msra.mxu0 0.0
    %160 = vmatprep.subr.mxu0 0.0
    %161 = vmatpush2.msra.mxu0 0.0
    %162 = vmatprep.subr.mxu0 0.0
    %163 = vmatpush2.msra.mxu0 0.0
    %164 = vmatprep.mubr.f32.mxu0 0.0
    %165 = vmatmul.mubr.f32.gmra.mxu0 %v77
    %v166 = vpop.f32.mrf.mxu0
    %v167 = vadd.f32 %v58, %v166
    %v168 = vpop.f32.mrf.mxu0
    %v169 = vadd.f32 %v62, %v168
    %170 = vmatprep.mubr.f32.mxu0 0.0
    %171 = vmatmul.mubr.f32.gmra.mxu0 %v80
    %v172 = vpop.f32.mrf.mxu0
    %v173 = vadd.f32 %v58, %v172
    %v174 = vpop.f32.mrf.mxu0
    %v175 = vadd.f32 %v62, %v174
    %176 = vmatprep.mubr.f32.mxu0 0.0
    %177 = vmatmul.mubr.f32.gmra.mxu0 %v83
    %v178 = vpop.f32.mrf.mxu0
    %v179 = vadd.f32 %v58, %v178
    %v180 = vpop.f32.mrf.mxu0
    %v181 = vadd.f32 %v62, %v180
    %182 = vmatprep.mubr.f32.mxu0 0.0
    %183 = vmatmul.mubr.f32.gmra.mxu0 %v86
    %v184 = vpop.f32.mrf.mxu0
    %v185 = vadd.f32 %v58, %v184
    %v186 = vpop.f32.mrf.mxu0
    %v187 = vadd.f32 %v62, %v186
    %188 = vmatprep.mubr.f32.mxu0 0.0
    %189 = vmatmul.mubr.f32.gmra.mxu0 %v89
    %v190 = vpop.f32.mrf.mxu0
    %v191 = vadd.f32 %v58, %v190
    %v192 = vpop.f32.mrf.mxu0
    %v193 = vadd.f32 %v62, %v192
    %194 = vmatprep.mubr.f32.mxu0 0.0
    %195 = vmatmul.mubr.f32.gmra.mxu0 %v92
    %v196 = vpop.f32.mrf.mxu0
    %v197 = vadd.f32 %v58, %v196
    %v198 = vpop.f32.mrf.mxu0
    %v199 = vadd.f32 %v62, %v198
    %200 = vmatprep.mubr.f32.mxu0 0.0
    %201 = vmatmul.mubr.f32.gmra.mxu0 %v95
    %v202 = vpop.f32.mrf.mxu0
    %v203 = vadd.f32 %v58, %v202
    %v204 = vpop.f32.mrf.mxu0
    %v205 = vadd.f32 %v62, %v204
    %206 = vmatprep.mubr.f32.mxu0 0.0
    %207 = vmatmul.mubr.f32.gmra.mxu0 %v98
    %v208 = vpop.f32.mrf.mxu0
    %v209 = vadd.f32 %v58, %v208
    %v210 = vpop.f32.mrf.mxu0
    %v211 = vadd.f32 %v62, %v210
    %212 = vdwg.mxu0
    %213 = vmatprep.subr.mxu0 0.0
    %214 = vmatpush1.msra.mxu0 0.0
    %215 = vmatprep.subr.mxu0 0.0
    %216 = vmatpush1.msra.mxu0 0.0
    %217 = vmatprep.subr.mxu0 0.0
    %218 = vmatpush1.msra.mxu0 0.0
    %219 = vmatprep.subr.mxu0 0.0
    %220 = vmatpush1.msra.mxu0 0.0
    %221 = vmatprep.subr.mxu0 0.0
    %222 = vmatpush1.msra.mxu0 0.0
    %223 = vmatprep.subr.mxu0 0.0
    %224 = vmatpush1.msra.mxu0 0.0
    %225 = vmatprep.subr.mxu0 0.0
    %226 = vmatpush1.msra.mxu0 0.0
    %227 = vmatprep.subr.mxu0 0.0
    %228 = vmatpush1.msra.mxu0 0.0
    %229 = vmatprep.subr.mxu0 0.0
    %230 = vmatpush1.msra.mxu0 0.0
    %231 = vmatprep.subr.mxu0 0.0
    %232 = vmatpush1.msra.mxu0 0.0
    %233 = vmatprep.subr.mxu0 0.0
    %234 = vmatpush1.msra.mxu0 0.0
    %235 = vmatprep.subr.mxu0 0.0
    %236 = vmatpush1.msra.mxu0 0.0
    %237 = vmatprep.subr.mxu0 %v52
    %238 = vmatpush1.msra.mxu0 %v51
    %239 = vmatprep.subr.mxu0 %v48
    %240 = vmatpush1.msra.mxu0 %v47
    %241 = vmatprep.subr.mxu0 %v44
    %242 = vmatpush1.msra.mxu0 %v43
    %243 = vmatprep.subr.mxu0 %v40
    %244 = vmatpush1.msra.mxu0 %v39
    %245 = vmatprep.subr.mxu0 0.0
    %246 = vmatpush2.msra.mxu0 0.0
    %247 = vmatprep.subr.mxu0 0.0
    %248 = vmatpush2.msra.mxu0 0.0
    %249 = vmatprep.subr.mxu0 0.0
    %250 = vmatpush2.msra.mxu0 0.0
    %251 = vmatprep.subr.mxu0 0.0
    %252 = vmatpush2.msra.mxu0 0.0
    %253 = vmatprep.subr.mxu0 0.0
    %254 = vmatpush2.msra.mxu0 0.0
    %255 = vmatprep.subr.mxu0 0.0
    %256 = vmatpush2.msra.mxu0 0.0
    %257 = vmatprep.subr.mxu0 0.0
    %258 = vmatpush2.msra.mxu0 0.0
    %259 = vmatprep.subr.mxu0 0.0
    %260 = vmatpush2.msra.mxu0 0.0
    %261 = vmatprep.subr.mxu0 0.0
    %262 = vmatpush2.msra.mxu0 0.0
    %263 = vmatprep.subr.mxu0 0.0
    %264 = vmatpush2.msra.mxu0 0.0
    %265 = vmatprep.subr.mxu0 0.0
    %266 = vmatpush2.msra.mxu0 0.0
    %267 = vmatprep.subr.mxu0 0.0
    %268 = vmatpush2.msra.mxu0 0.0
    %269 = vmatprep.subr.mxu0 0.0
    %270 = vmatpush2.msra.mxu0 0.0
    %271 = vmatprep.subr.mxu0 0.0
    %272 = vmatpush2.msra.mxu0 0.0
    %273 = vmatprep.subr.mxu0 0.0
    %274 = vmatpush2.msra.mxu0 0.0
    %275 = vmatprep.subr.mxu0 0.0
    %276 = vmatpush2.msra.mxu0 0.0
    %277 = vmatprep.mubr.f32.mxu0 0.0
    %278 = vmatmul.mubr.f32.gmra.mxu0 %v77
    %v279 = vpop.f32.mrf.mxu0
    %v280 = vadd.f32 %v66, %v279
    %v281 = vpop.f32.mrf.mxu0
    %v282 = vadd.f32 %v70, %v281
    %283 = vmatprep.mubr.f32.mxu0 0.0
    %284 = vmatmul.mubr.f32.gmra.mxu0 %v80
    %v285 = vpop.f32.mrf.mxu0
    %v286 = vadd.f32 %v66, %v285
    %v287 = vpop.f32.mrf.mxu0
    %v288 = vadd.f32 %v70, %v287
    %289 = vmatprep.mubr.f32.mxu0 0.0
    %290 = vmatmul.mubr.f32.gmra.mxu0 %v83
    %v291 = vpop.f32.mrf.mxu0
    %v292 = vadd.f32 %v66, %v291
    %v293 = vpop.f32.mrf.mxu0
    %v294 = vadd.f32 %v70, %v293
    %295 = vmatprep.mubr.f32.mxu0 0.0
    %296 = vmatmul.mubr.f32.gmra.mxu0 %v86
    %v297 = vpop.f32.mrf.mxu0
    %v298 = vadd.f32 %v66, %v297
    %v299 = vpop.f32.mrf.mxu0
    %v300 = vadd.f32 %v70, %v299
    %301 = vmatprep.mubr.f32.mxu0 0.0
    %302 = vmatmul.mubr.f32.gmra.mxu0 %v89
    %v303 = vpop.f32.mrf.mxu0
    %v304 = vadd.f32 %v66, %v303
    %v305 = vpop.f32.mrf.mxu0
    %v306 = vadd.f32 %v70, %v305
    %307 = vmatprep.mubr.f32.mxu0 0.0
    %308 = vmatmul.mubr.f32.gmra.mxu0 %v92
    %v309 = vpop.f32.mrf.mxu0
    %v310 = vadd.f32 %v66, %v309
    %v311 = vpop.f32.mrf.mxu0
    %v312 = vadd.f32 %v70, %v311
    %313 = vmatprep.mubr.f32.mxu0 0.0
    %314 = vmatmul.mubr.f32.gmra.mxu0 %v95
    %v315 = vpop.f32.mrf.mxu0
    %v316 = vadd.f32 %v66, %v315
    %v317 = vpop.f32.mrf.mxu0
    %v318 = vadd.f32 %v70, %v317
    %319 = vmatprep.mubr.f32.mxu0 0.0
    %320 = vmatmul.mubr.f32.gmra.mxu0 %v98
    %v321 = vpop.f32.mrf.mxu0
    %v322 = vadd.f32 %v66, %v321
    %v323 = vpop.f32.mrf.mxu0
    %v324 = vadd.f32 %v70, %v323
    %325 = vdwg.mxu0
    %326 = vst [vmem:[#allocation5] sm:$0xff] %v167
    %327 = vst [vmem:[#allocation5 + $0x8] sm:$0xff] %v169
    %328 = vst [vmem:[#allocation5 + $0x10] sm:$0xff] %v280
    %329 = vst [vmem:[#allocation5 + $0x18] sm:$0xff] %v282
    %330 = vst [vmem:[#allocation5 + $0x20] sm:$0xff] %v173
    %331 = vst [vmem:[#allocation5 + $0x28] sm:$0xff] %v175
    %332 = vst [vmem:[#allocation5 + $0x30] sm:$0xff] %v286
    %333 = vst [vmem:[#allocation5 + $0x38] sm:$0xff] %v288
    %334 = vst [vmem:[#allocation5 + $0x40] sm:$0xff] %v179
    %335 = vst [vmem:[#allocation5 + $0x48] sm:$0xff] %v181
    %336 = vst [vmem:[#allocation5 + $0x50] sm:$0xff] %v292
    %337 = vst [vmem:[#allocation5 + $0x58] sm:$0xff] %v294
    %338 = vst [vmem:[#allocation5 + $0x60] sm:$0xff] %v185
    %339 = vst [vmem:[#allocation5 + $0x68] sm:$0xff] %v187
    %340 = vst [vmem:[#allocation5 + $0x70] sm:$0xff] %v298
    %341 = vst [vmem:[#allocation5 + $0x78] sm:$0xff] %v300
    %342 = vst [vmem:[#allocation5 + $0x80] sm:$0xff] %v191
    %343 = vst [vmem:[#allocation5 + $0x88] sm:$0xff] %v193
    %344 = vst [vmem:[#allocation5 + $0x90] sm:$0xff] %v304
    %345 = vst [vmem:[#allocation5 + $0x98] sm:$0xff] %v306
    %346 = vst [vmem:[#allocation5 + $0xa0] sm:$0xff] %v197
    %347 = vst [vmem:[#allocation5 + $0xa8] sm:$0xff] %v199
    %348 = vst [vmem:[#allocation5 + $0xb0] sm:$0xff] %v310
    %349 = vst [vmem:[#allocation5 + $0xb8] sm:$0xff] %v312
    %350 = vst [vmem:[#allocation5 + $0xc0] sm:$0xff] %v203
    %351 = vst [vmem:[#allocation5 + $0xc8] sm:$0xff] %v205
    %352 = vst [vmem:[#allocation5 + $0xd0] sm:$0xff] %v316
    %353 = vst [vmem:[#allocation5 + $0xd8] sm:$0xff] %v318
    %354 = vst [vmem:[#allocation5 + $0xe0] sm:$0xff] %v209
    %355 = vst [vmem:[#allocation5 + $0xe8] sm:$0xff] %v211
    %356 = vst [vmem:[#allocation5 + $0xf0] sm:$0xff] %v322
    %357 = vst [vmem:[#allocation5 + $0xf8] sm:$0xff] %v324
    // Predicated region
    $region18: #{tpu_custom_call.1} parent=1 // pred_check
      _
    $region19: #{tpu_custom_call.1} parent=1 // pred_check_branch
      %359 = sbr.rel (0) target = $region21
    $region20: #{tpu_custom_call.1} parent=1 // pred_region
      %s361 = ssub.s32 4096, 4096
      %362 = vsyncadd [#allocation4], %s361
      %s363 = sshll.u32 [#allocation5], 4
      %s364 = int_to_ptr.vmem [resolvable:$true] %s363
      %369 = dma.vmem_to_hbm [thread:$0]  %s364, 4096, %s3, [#allocation4], 512, 512, 32
    $region21: #{tpu_custom_call.1} parent=1 // pred_fallthru
      _
    // Predicated region
    $region22: #{tpu_custom_call.1} parent=1 // pred_check
      _
    $region23: #{tpu_custom_call.1} parent=1 // pred_check_branch
      %371 = sbr.rel (0) target = $region25
    $region24: #{tpu_custom_call.1} parent=1 // pred_region
      %372 = dma.done [#allocation4], 4096
    $region25: #{tpu_custom_call.1} parent=1 // pred_fallthru
      _
    %373 = vsyncpa [#allocation3], 1
    %374 = vsyncpa [#allocation4], 1

</llo_original>
